<compile_context>
chip_gen: v5e
topology: v5e:2x2
jax: 0.10.0
libtpu: 0.0.40
codegen_flags: <defaults>
</compile_context>

<pallas_src>
import functools

import numpy as np
import jax
import jax.numpy as jnp
from jax.experimental import pallas as pl
from jax.experimental.pallas import tpu as pltpu


_MiB = 1024 * 1024
_KRON_LIMIT_BYTES = 6 * _MiB   # single-copy cap for the fused 2D-DFT matrix


def _round_up(x, m):
    return -(-x // m) * m


# --------------------------------------------------------------------------
# Generation-aware VMEM knobs
# --------------------------------------------------------------------------
@functools.lru_cache(maxsize=1)
def _vmem_config():
    """(per-step tile budget, scoped-vmem limit) picked per TPU generation."""
    try:
        cap = int(pltpu.get_tpu_info().vmem_capacity_bytes)
    except Exception:                    # unknown runtime -> stay conservative
        cap = 0
    if cap >= 100 * _MiB:                # v5e / v6e: 128 MiB physical VMEM
        return 64 * _MiB, 100 * _MiB
    return 24 * _MiB, 48 * _MiB          # v7x (64 MiB per core) or unknown


# --------------------------------------------------------------------------
# DFT matrix construction (numpy, float64 phases, cached across calls)
# --------------------------------------------------------------------------
def _herm_weights(n):
    """Weights for the half spectrum (bins 0..n//2) of a real-input DFT."""
    w = np.full(n // 2 + 1, 2.0)
    w[0] = 1.0
    if n % 2 == 0:
        w[n // 2] = 1.0
    return w


@functools.lru_cache(maxsize=8)
def _kron_dft_matrix(H, W):
    """Fused real-input 2D-DFT matrix [Re(G) | Im(G)], Hermitian-folded over H.

    G[(h,w),(p,q)] = wgt[p] * exp(-2*pi*i*(p*h/H + q*w/W)),  p in [0, H//2].
    Each half is zero-padded to a multiple of 128 columns so the in-kernel
    split of the fused matmul result is lane-tile aligned; padded columns are
    exactly zero and contribute 0 to the magnitude sum.
    Phases use exact integer math mod the period (no f32 phase error).
    """
    Hr = H // 2 + 1
    hrw = Hr * W
    hrw_pad = _round_up(hrw, 128)
    h = np.arange(H)
    w = np.arange(W)
    p = np.arange(Hr)
    ph = (h[:, None] * p[None, :]) % H                     # (H, Hr) exact ints
    qw = (w[:, None] * w[None, :]) % W                     # (W, W)
    ang = (-(2.0 * np.pi / H) * ph)[:, None, :, None] + \
          (-(2.0 * np.pi / W) * qw)[None, :, None, :]      # (H, W, Hr, W) f64
    wgt = _herm_weights(H)[None, None, :, None]
    gr = (np.cos(ang) * wgt).reshape(H * W, hrw)
    gi = (np.sin(ang) * wgt).reshape(H * W, hrw)
    gc = np.zeros((H * W, 2 * hrw_pad), np.float32)
    gc[:, :hrw] = gr
    gc[:, hrw_pad:hrw_pad + hrw] = gi
    return jnp.asarray(gc), hrw_pad


@functools.lru_cache(maxsize=8)
def _separable_dft_matrices(H, W):
    """Hermitian-weighted half W-rDFT (W, W//2+1), full H-DFT (H, H) + their sum."""
    Wr = W // 2 + 1
    w = np.arange(W)
    q = np.arange(Wr)
    aw = -(2.0 * np.pi / W) * ((w[:, None] * q[None, :]) % W)
    wgt = _herm_weights(W)[None, :]
    crw = (np.cos(aw) * wgt).astype(np.float32)
    ciw = (np.sin(aw) * wgt).astype(np.float32)

    h = np.arange(H)
    p = np.arange(H)
    ah = -(2.0 * np.pi / H) * ((h[:, None] * p[None, :]) % H)
    frh = np.cos(ah)
    fih = np.sin(ah)
    fsh = (frh + fih).astype(np.float32)                   # hoisted Karatsuba sum
    return (jnp.asarray(crw), jnp.asarray(ciw),
            jnp.asarray(frh.astype(np.float32)),
            jnp.asarray(fih.astype(np.float32)),
            jnp.asarray(fsh))


# --------------------------------------------------------------------------
# Kernels
# --------------------------------------------------------------------------
def _fft_loss_small_kernel(x_ref, y_ref, gc_ref, out_ref, *, hrw_pad):
    """One block of TB flattened slices: one fused (TB, H*W) @ [Re|Im] matmul."""
    d = x_ref[...].astype(jnp.float32) - y_ref[...].astype(jnp.float32)
    r = jnp.dot(d, gc_ref[...], preferred_element_type=jnp.float32)
    rr = r[:, :hrw_pad]                 # 128-aligned split (no lane shifts)
    ri = r[:, hrw_pad:]
    partial = jnp.sum(jnp.sqrt(rr * rr + ri * ri))
    out_ref[...] = jnp.broadcast_to(partial, (1, 128))


def _fft_loss_large_kernel(x_ref, y_ref, crw_ref, ciw_ref, frh_ref, fih_ref,
                           fsh_ref, out_ref):
    """Separable path: half-spectrum W-transform first, then full-H complex DFT."""
    tb, h, w = x_ref.shape
    wr = crw_ref.shape[1]
    d = x_ref[...].astype(jnp.float32) - y_ref[...].astype(jnp.float32)
    d2 = d.reshape(tb * h, w)
    # Hermitian half-spectrum W-transform FIRST (weights folded into crw/ciw):
    # real input -> 2 matmuls, half-width output.
    ur = jnp.dot(d2, crw_ref[...], preferred_element_type=jnp.float32)
    ui = jnp.dot(d2, ciw_ref[...], preferred_element_type=jnp.float32)
    # Transpose only the half-width complex intermediate: (tb,h,wr) -> (tb*wr,h).
    urt = jnp.swapaxes(ur.reshape(tb, h, wr), 1, 2).reshape(tb * wr, h)
    uit = jnp.swapaxes(ui.reshape(tb, h, wr), 1, 2).reshape(tb * wr, h)
    # Full-H complex DFT with the 3-real-matmul product; (frh+fih) precomputed.
    p1 = jnp.dot(urt, frh_ref[...], preferred_element_type=jnp.float32)
    p2 = jnp.dot(uit, fih_ref[...], preferred_element_type=jnp.float32)
    p3 = jnp.dot(urt + uit, fsh_ref[...], preferred_element_type=jnp.float32)
    rr = p1 - p2
    ri = p3 - p1 - p2
    partial = jnp.sum(jnp.sqrt(rr * rr + ri * ri))
    out_ref[...] = jnp.broadcast_to(partial, (1, 128))


# --------------------------------------------------------------------------
# Tiling helpers
# --------------------------------------------------------------------------
def _choose_batch_block(bc, per_slice_bytes, const_bytes, lane_flat, budget):
    """Pick TB (slices per grid step) -> (TB, padded BC)."""
    # ~20% headroom for Mosaic internal scratch / output buffers / spill.
    avail = max(int(0.8 * (budget - const_bytes)), per_slice_bytes)
    tb = int(max(1, avail // per_slice_bytes))
    if tb >= bc:
        if bc >= 16:
            # v7x megacore: split into >= 2 blocks so both TensorCores get work.
            tb = -(-bc // 2)
            if lane_flat:
                tb = _round_up(tb, 8)
            if tb >= bc:
                return bc, bc
        else:
            return bc, bc
    elif lane_flat:
        # 2-D (batch, H*W) blocks: keep the sublane (batch) dim 8-aligned.
        tb = max(8, (tb // 8) * 8)
        if tb >= bc:
            return bc, bc
    nb = -(-bc // tb)
    return tb, nb * tb


def _pad_batch(a, bcp):
    if a.shape[0] == bcp:
        return a
    pad = [(0, bcp - a.shape[0])] + [(0, 0)] * (a.ndim - 1)
    # Zero rows -> zero diff -> zero DFT magnitude -> no contribution to the sum.
    return jnp.pad(a, pad)


def _const_spec(block_shape):
    """Grid-invariant operand: single-buffered when this JAX supports it."""
    index_map = lambda i: (0,) * len(block_shape)
    try:
        return pl.BlockSpec(block_shape, index_map, pipeline_mode=pl.Buffered(1))
    except TypeError:
        return pl.BlockSpec(block_shape, index_map)


# --------------------------------------------------------------------------
# pallas_call wrappers
# --------------------------------------------------------------------------
def _fft_loss_small(xf, yf, H, W, in_bytes):
    bc, hw = xf.shape
    gc, hrw_pad = _kron_dft_matrix(H, W)
    budget, vmem_limit = _vmem_config()

    const_bytes = hw * 2 * hrw_pad * 4                        # single-buffered matrix
    per_slice = 2 * 2 * hw * in_bytes + hw * 4 + 4 * hrw_pad * 4
    tb, bcp = _choose_batch_block(bc, per_slice, const_bytes, True, budget)
    xf, yf = _pad_batch(xf, bcp), _pad_batch(yf, bcp)
    nb = bcp // tb

    cost = pl.CostEstimate(
        flops=int(2 * bcp * hw * 2 * hrw_pad + 6 * bcp * hrw_pad),
        transcendentals=int(bcp * hrw_pad),
        bytes_accessed=int(2 * bcp * hw * in_bytes + const_bytes + nb * 128 * 4))

    kernel = functools.partial(_fft_loss_small_kernel, hrw_pad=hrw_pad)
    return pl.pallas_call(
        kernel,
        out_shape=jax.ShapeDtypeStruct((nb, 1, 128), jnp.float32),
        grid_spec=pltpu.PrefetchScalarGridSpec(
            num_scalar_prefetch=0,
            grid=(nb,),
            in_specs=[
                pl.BlockSpec((tb, hw), lambda i: (i, 0)),     # x block
                pl.BlockSpec((tb, hw), lambda i: (i, 0)),     # y block
                _const_spec((hw, 2 * hrw_pad)),               # [Re(G)|Im(G)]
            ],
            out_specs=pl.BlockSpec((None, 1, 128), lambda i: (i, 0, 0)),
        ),
        compiler_params=pltpu.CompilerParams(
            dimension_semantics=("parallel",),   # independent partials -> megacore OK
            vmem_limit_bytes=vmem_limit),
        cost_estimate=cost,
    )(xf, yf, gc)


def _fft_loss_large(xs, ys, H, W, in_bytes):
    bc = xs.shape[0]
    Wr = W // 2 + 1
    crw, ciw, frh, fih, fsh = _separable_dft_matrices(H, W)
    budget, vmem_limit = _vmem_config()

    const_bytes = (2 * W * Wr + 3 * H * H) * 4                 # single-buffered matrices
    per_slice = 4 * H * W * in_bytes + (H * W + 10 * H * Wr) * 4
    tb, bcp = _choose_batch_block(bc, per_slice, const_bytes, False, budget)
    xs, ys = _pad_batch(xs, bcp), _pad_batch(ys, bcp)
    nb = bcp // tb

    cost = pl.CostEstimate(
        flops=int(4 * bcp * H * W * Wr + 6 * bcp * Wr * H * H + 10 * bcp * H * Wr),
        transcendentals=int(bcp * H * Wr),
        bytes_accessed=int(2 * bcp * H * W * in_bytes + const_bytes + nb * 128 * 4))

    # TODO(synk): for very large H,W (>= ~1024) tile the H-transform over row
    # chunks of the (tb*Wr, H) intermediate so the f32 temps stay inside v7x's
    # 64 MiB VMEM even at tb=1 (the restructure already halved them).
    return pl.pallas_call(
        _fft_loss_large_kernel,
        out_shape=jax.ShapeDtypeStruct((nb, 1, 128), jnp.float32),
        grid_spec=pltpu.PrefetchScalarGridSpec(
            num_scalar_prefetch=0,
            grid=(nb,),
            in_specs=[
                pl.BlockSpec((tb, H, W), lambda i: (i, 0, 0)),  # x block
                pl.BlockSpec((tb, H, W), lambda i: (i, 0, 0)),  # y block
                _const_spec((W, Wr)),                           # Re(rDFT_W), weighted
                _const_spec((W, Wr)),                           # Im(rDFT_W), weighted
                _const_spec((H, H)),                            # Re(F_H)
                _const_spec((H, H)),                            # Im(F_H)
                _const_spec((H, H)),                            # Re(F_H)+Im(F_H)
            ],
            out_specs=pl.BlockSpec((None, 1, 128), lambda i: (i, 0, 0)),
        ),
        compiler_params=pltpu.CompilerParams(
            dimension_semantics=("parallel",),
            vmem_limit_bytes=vmem_limit),
        cost_estimate=cost,
    )(xs, ys, crw, ciw, frh, fih, fsh)


def fft_loss(x, y):
    """Pallas implementation of fftLoss.forward(x, y) -> scalar float32."""
    B, C, H, W = x.shape
    bc = B * C
    total = bc * H * W
    in_bytes = jnp.dtype(x.dtype).itemsize
    hrw_pad = _round_up((H // 2 + 1) * W, 128)

    # Small images: fused (Kronecker) 2D-DFT matrix -> ONE matmul per block.
    if (H * W) * 2 * hrw_pad * 4 <= _KRON_LIMIT_BYTES:
        partials = _fft_loss_small(x.reshape(bc, H * W), y.reshape(bc, H * W),
                                   H, W, in_bytes)
    else:
        partials = _fft_loss_large(x.reshape(bc, H, W), y.reshape(bc, H, W),
                                   H, W, in_bytes)
    # Final reduction + mean in plain JAX: keeps the grid axis 'parallel'
    # (both v7x TensorCores usable) and avoids serial SMEM accumulation.
    return jnp.sum(partials[:, 0, 0]) / jnp.float32(total)


if __name__ == "__main__":
    key = jax.random.PRNGKey(0)
    kx, ky = jax.random.split(key)

    B, C, H, W = 2, 4, 16, 16
    x = jax.random.normal(kx, (B, C, H, W), dtype=jnp.float32)
    y = jax.random.normal(ky, (B, C, H, W), dtype=jnp.float32)

    loss = jax.block_until_ready(fft_loss(x, y))

    # Sanity check against the pure-JAX reference (same math as the PyTorch module).
    ref = jnp.mean(jnp.abs(jnp.fft.fft2(x) - jnp.fft.fft2(y)))
    assert jnp.allclose(loss, ref, rtol=1e-4, atol=1e-4), (loss, ref)

    print("KERNEL_OK")
</pallas_src>

<mosaic_0001>
module attributes {stable_mosaic.version = 11 : i64} {
  func.func @_fft_loss_small_kernel(%arg0: i32, %arg1: memref<8x256xf32, #tpu.memory_space<vmem>>, %arg2: memref<8x256xf32, #tpu.memory_space<vmem>>, %arg3: memref<256x512xf32, #tpu.memory_space<vmem>>, %arg4: memref<1x1x128xf32, #tpu.memory_space<vmem>>) attributes {dimension_semantics = [#tpu.dimension_semantics<parallel>], iteration_bounds = array<i64: 1>, scalar_prefetch = 0 : i64, scratch_operands = 0 : i64, tpu.core_type = #tpu.core_type<tc>, window_params = [{transform_indices = @transform_0, window_bounds = array<i64: 8, 256>}, {transform_indices = @transform_1, window_bounds = array<i64: 8, 256>}, {pipeline_mode = #tpu.pipeline_mode<synchronous>, transform_indices = @transform_2, window_bounds = array<i64: 256, 512>}, {transform_indices = @transform_3, window_bounds = array<i64: 1, 1, 128>}]} {
    %c0 = arith.constant 0 : index
    %c0_0 = arith.constant 0 : index
    %0 = vector.load %arg1[%c0, %c0_0] : memref<8x256xf32, #tpu.memory_space<vmem>>, vector<8x256xf32>
    %c0_1 = arith.constant 0 : index
    %c0_2 = arith.constant 0 : index
    %1 = vector.load %arg2[%c0_1, %c0_2] : memref<8x256xf32, #tpu.memory_space<vmem>>, vector<8x256xf32>
    %2 = arith.subf %0, %1 : vector<8x256xf32>
    %c0_3 = arith.constant 0 : index
    %c0_4 = arith.constant 0 : index
    %3 = vector.load %arg3[%c0_3, %c0_4] : memref<256x512xf32, #tpu.memory_space<vmem>>, vector<256x512xf32>
    %cst = arith.constant dense<0.000000e+00> : vector<8x512xf32>
    %4 = tpu.matmul %2, %3, %cst {dimension_numbers = #tpu.dot_dimension_numbers<[1], [0], [0], [1], [0, 0, 1, 1], [], []>} : vector<8x256xf32>, vector<256x512xf32>, vector<8x512xf32> -> vector<8x512xf32>
    %5 = vector.extract_strided_slice %4 {offsets = [0, 0], sizes = [8, 256], strides = [1, 1]} : vector<8x512xf32> to vector<8x256xf32>
    %6 = vector.extract_strided_slice %4 {offsets = [0, 256], sizes = [8, 256], strides = [1, 1]} : vector<8x512xf32> to vector<8x256xf32>
    %7 = arith.mulf %5, %5 : vector<8x256xf32>
    %8 = arith.mulf %6, %6 : vector<8x256xf32>
    %9 = arith.addf %7, %8 : vector<8x256xf32>
    %10 = math.sqrt %9 : vector<8x256xf32>
    %11 = vector.shape_cast %10 : vector<8x256xf32> to vector<1x8x256xf32>
    %cst_5 = arith.constant dense<0.000000e+00> : vector<1xf32>
    %12 = vector.multi_reduction <add>, %11, %cst_5 [1, 2] : vector<1x8x256xf32> to vector<1xf32>
    %13 = vector.shape_cast %12 : vector<1xf32> to vector<1x1x1xf32>
    %14 = vector.extract %13[0, 0, 0] : f32 from vector<1x1x1xf32>
    %15 = vector.broadcast %14 : f32 to vector<1x128xf32>
    %c0_6 = arith.constant 0 : index
    %c0_7 = arith.constant 0 : index
    %c0_8 = arith.constant 0 : index
    %16 = vector.load %arg4[%c0_6, %c0_7, %c0_8] : memref<1x1x128xf32, #tpu.memory_space<vmem>>, vector<1x1x128xf32>
    %17 = vector.shape_cast %16 : vector<1x1x128xf32> to vector<1x128xf32>
    %18 = vector.shape_cast %15 : vector<1x128xf32> to vector<1x1x128xf32>
    tpu.vector_store %arg4[%c0_6, %c0_7, %c0_8], %18 {strides = array<i32>} : memref<1x1x128xf32, #tpu.memory_space<vmem>>, vector<1x1x128xf32>,
    return
  }
  func.func @transform_0(%arg0: i32) -> (i32, i32) {
    %c0_i32 = arith.constant 0 : i32
    %c0_i32_0 = arith.constant 0 : i32
    return %arg0, %c0_i32 : i32, i32
  }
  func.func @transform_1(%arg0: i32) -> (i32, i32) {
    %c0_i32 = arith.constant 0 : i32
    %c0_i32_0 = arith.constant 0 : i32
    return %arg0, %c0_i32 : i32, i32
  }
  func.func @transform_2(%arg0: i32) -> (i32, i32) {
    %c0_i32 = arith.constant 0 : i32
    %c0_i32_0 = arith.constant 0 : i32
    %c0_i32_1 = arith.constant 0 : i32
    return %c0_i32, %c0_i32_0 : i32, i32
  }
  func.func @transform_3(%arg0: i32) -> (i32, i32, i32) {
    %c0_i32 = arith.constant 0 : i32
    %c0_i32_0 = arith.constant 0 : i32
    %c0_i32_1 = arith.constant 0 : i32
    return %arg0, %c0_i32, %c0_i32_0 : i32, i32, i32
  }
}

</mosaic_0001>

<llo_original>
// kernel: tpu_custom_call.1
$region0: #{tpu_custom_call.1}
  #allocation0 [shape = 'u32[]', space=smem, size = 0x4, offset = 0x4, fixed_abs, tag = 'smem constant byte address 0x4 - core index']
  #allocation1 [shape = 'u32[72,128]{1,0:T(1,128)}', space=vmem, size = 0x9000, scoped, tag = 'internal scratch']
  %s0 = inlined_call_operand.hbm [shape: f32[8,256], index: 0, kind: input, shape index: {}]
  %s1 = inlined_call_operand.hbm [shape: f32[8,256], index: 1, kind: input, shape index: {}]
  %s2 = inlined_call_operand.hbm [shape: f32[256,512], index: 2, kind: input, shape index: {}]
  %s3 = inlined_call_operand.hbm [shape: f32[1,1,128], index: 3, kind: output, shape index: {}]
  %s4 = sld [smem:[#allocation0]]
  $region34: #{tpu_custom_call.1} parent=0
    _
  %s6 = ssub.s32 1, %s4
  %s7 = scalar_select 0, %s6, %s4
  $region1: #{tpu_custom_call.1} parent=0
    #allocation2 [shape = 'u8[8192]{0}', space=vmem, size = 0x2000, scoped, tag = 'input window, operand 0, single buffered']
    #allocation3 [shape = 's32[1]{0}', space=sflag, size = 0x4, scoped, tag = 'scoped memory for tpu_custom_call.1']
    #allocation4 [shape = 's32[1]{0}', space=sflag, size = 0x4, scoped, tag = 'scoped memory for tpu_custom_call.1']
    #allocation5 [shape = 'u8[8192]{0}', space=vmem, size = 0x2000, scoped, tag = 'input window, operand 1, single buffered']
    #allocation6 [shape = 's32[1]{0}', space=sflag, size = 0x4, scoped, tag = 'scoped memory for tpu_custom_call.1']
    #allocation7 [shape = 'u8[524288]{0}', space=vmem, size = 0x80000, scoped, tag = 'input window, operand 2, single buffered']
    #allocation8 [shape = 'u8[512]{0}', space=vmem, size = 0x400, scoped, tag = 'output window, operand 0, single buffered']
    %8 = vsyncpa [#allocation3], 0
    %9 = vsyncpa [#allocation6], 0
    %10 = vsyncpa [#allocation4], 0
    // Predicated region
    $region2: #{tpu_custom_call.1} parent=1 // pred_check
      _
    $region3: #{tpu_custom_call.1} parent=1 // pred_check_branch
      %12 = sbr.rel (0) target = $region5
    $region4: #{tpu_custom_call.1} parent=1 // pred_region
      %14 = vsyncadd [#allocation3], 0
      %s16 = sshll.u32 %s0, 4
      %s17 = int_to_ptr.hbm [resolvable:$true] %s16
      %s18 = sshll.u32 [#allocation2], 4
      %s19 = int_to_ptr.vmem [resolvable:$true] %s18
      %21 = dma.hbm_to_vmem [thread:$0]  %s17, 256, %s19, [#allocation3]
    $region5: #{tpu_custom_call.1} parent=1 // pred_fallthru
      _
    // Predicated region
    $region6: #{tpu_custom_call.1} parent=1 // pred_check
      _
    $region7: #{tpu_custom_call.1} parent=1 // pred_check_branch
      %23 = sbr.rel (0) target = $region9
    $region8: #{tpu_custom_call.1} parent=1 // pred_region
      %25 = vsyncadd [#allocation6], 0
      %s27 = sshll.u32 %s1, 4
      %s28 = int_to_ptr.hbm [resolvable:$true] %s27
      %s29 = sshll.u32 [#allocation5], 4
      %s30 = int_to_ptr.vmem [resolvable:$true] %s29
      %32 = dma.hbm_to_vmem [thread:$0]  %s28, 256, %s30, [#allocation6]
    $region9: #{tpu_custom_call.1} parent=1 // pred_fallthru
      _
    // Predicated region
    $region10: #{tpu_custom_call.1} parent=1 // pred_check
      _
    $region11: #{tpu_custom_call.1} parent=1 // pred_check_branch
      %34 = sbr.rel (0) target = $region13
    $region12: #{tpu_custom_call.1} parent=1 // pred_region
      %36 = vsyncadd [#allocation6], 0
      %s37 = sshll.u32 %s2, 4
      %s38 = int_to_ptr.hbm [resolvable:$true] %s37
      %s39 = sshll.u32 [#allocation7], 4
      %s40 = int_to_ptr.vmem [resolvable:$true] %s39
      %45 = dma.hbm_to_vmem [thread:$0]  %s38, 16384, %s40, [#allocation6], 512, 512, 32
    $region13: #{tpu_custom_call.1} parent=1 // pred_fallthru
      _
    // Predicated region
    $region14: #{tpu_custom_call.1} parent=1 // pred_check
      _
    $region15: #{tpu_custom_call.1} parent=1 // pred_check_branch
      %47 = sbr.rel (0) target = $region17
    $region16: #{tpu_custom_call.1} parent=1 // pred_region
      %49 = dma.done [#allocation3], 256
    $region17: #{tpu_custom_call.1} parent=1 // pred_fallthru
      _
    // Predicated region
    $region18: #{tpu_custom_call.1} parent=1 // pred_check
      _
    $region19: #{tpu_custom_call.1} parent=1 // pred_check_branch
      %51 = sbr.rel (0) target = $region21
    $region20: #{tpu_custom_call.1} parent=1 // pred_region
      %53 = dma.done [#allocation6], 256
    $region21: #{tpu_custom_call.1} parent=1 // pred_fallthru
      _
    // Predicated region
    $region22: #{tpu_custom_call.1} parent=1 // pred_check
      _
    $region23: #{tpu_custom_call.1} parent=1 // pred_check_branch
      %55 = sbr.rel (0) target = $region25
    $region24: #{tpu_custom_call.1} parent=1 // pred_region
      %57 = dma.done [#allocation6], 16384
    $region25: #{tpu_custom_call.1} parent=1 // pred_fallthru
      _
    %v58 = vld [vmem:[#allocation2] sm:$0xff]
    %v59 = vld [vmem:[#allocation2 + $0x8] sm:$0xff]
    %v60 = vld [vmem:[#allocation5] sm:$0xff]
    %v61 = vld [vmem:[#allocation5 + $0x8] sm:$0xff]
    %v62 = vsub.f32 %v58, %v60
    %v63 = vsub.f32 %v59, %v61
    %v64 = vld [vmem:[#allocation7] sm:$0xff]
    %v65 = vld [vmem:[#allocation7 + $0x8] sm:$0xff]
    %v66 = vld [vmem:[#allocation7 + $0x10] sm:$0xff]
    %v67 = vld [vmem:[#allocation7 + $0x18] sm:$0xff]
    %v68 = vld [vmem:[#allocation7 + $0x20] sm:$0xff]
    %v69 = vld [vmem:[#allocation7 + $0x28] sm:$0xff]
    %v70 = vld [vmem:[#allocation7 + $0x30] sm:$0xff]
    %v71 = vld [vmem:[#allocation7 + $0x38] sm:$0xff]
    %v72 = vld [vmem:[#allocation7 + $0x40] sm:$0xff]
    %v73 = vld [vmem:[#allocation7 + $0x48] sm:$0xff]
    %v74 = vld [vmem:[#allocation7 + $0x50] sm:$0xff]
    %v75 = vld [vmem:[#allocation7 + $0x58] sm:$0xff]
    %v76 = vld [vmem:[#allocation7 + $0x60] sm:$0xff]
    %v77 = vld [vmem:[#allocation7 + $0x68] sm:$0xff]
    %v78 = vld [vmem:[#allocation7 + $0x70] sm:$0xff]
    %v79 = vld [vmem:[#allocation7 + $0x78] sm:$0xff]
    %v80 = vld [vmem:[#allocation7 + $0x80] sm:$0xff]
    %v81 = vld [vmem:[#allocation7 + $0x88] sm:$0xff]
    %v82 = vld [vmem:[#allocation7 + $0x90] sm:$0xff]
    %v83 = vld [vmem:[#allocation7 + $0x98] sm:$0xff]
    %v84 = vld [vmem:[#allocation7 + $0xa0] sm:$0xff]
    %v85 = vld [vmem:[#allocation7 + $0xa8] sm:$0xff]
    %v86 = vld [vmem:[#allocation7 + $0xb0] sm:$0xff]
    %v87 = vld [vmem:[#allocation7 + $0xb8] sm:$0xff]
    %v88 = vld [vmem:[#allocation7 + $0xc0] sm:$0xff]
    %v89 = vld [vmem:[#allocation7 + $0xc8] sm:$0xff]
    %v90 = vld [vmem:[#allocation7 + $0xd0] sm:$0xff]
    %v91 = vld [vmem:[#allocation7 + $0xd8] sm:$0xff]
    %v92 = vld [vmem:[#allocation7 + $0xe0] sm:$0xff]
    %v93 = vld [vmem:[#allocation7 + $0xe8] sm:$0xff]
    %v94 = vld [vmem:[#allocation7 + $0xf0] sm:$0xff]
    %v95 = vld [vmem:[#allocation7 + $0xf8] sm:$0xff]
    %v96 = vld [vmem:[#allocation7 + $0x100] sm:$0xff]
    %v97 = vld [vmem:[#allocation7 + $0x108] sm:$0xff]
    %v98 = vld [vmem:[#allocation7 + $0x110] sm:$0xff]
    %v99 = vld [vmem:[#allocation7 + $0x118] sm:$0xff]
    %v100 = vld [vmem:[#allocation7 + $0x120] sm:$0xff]
    %v101 = vld [vmem:[#allocation7 + $0x128] sm:$0xff]
    %v102 = vld [vmem:[#allocation7 + $0x130] sm:$0xff]
    %v103 = vld [vmem:[#allocation7 + $0x138] sm:$0xff]
    %v104 = vld [vmem:[#allocation7 + $0x140] sm:$0xff]
    %v105 = vld [vmem:[#allocation7 + $0x148] sm:$0xff]
    %v106 = vld [vmem:[#allocation7 + $0x150] sm:$0xff]
    %v107 = vld [vmem:[#allocation7 + $0x158] sm:$0xff]
    %v108 = vld [vmem:[#allocation7 + $0x160] sm:$0xff]
    %v109 = vld [vmem:[#allocation7 + $0x168] sm:$0xff]
    %v110 = vld [vmem:[#allocation7 + $0x170] sm:$0xff]
    %v111 = vld [vmem:[#allocation7 + $0x178] sm:$0xff]
    %v112 = vld [vmem:[#allocation7 + $0x180] sm:$0xff]
    %v113 = vld [vmem:[#allocation7 + $0x188] sm:$0xff]
    %v114 = vld [vmem:[#allocation7 + $0x190] sm:$0xff]
    %v115 = vld [vmem:[#allocation7 + $0x198] sm:$0xff]
    %v116 = vld [vmem:[#allocation7 + $0x1a0] sm:$0xff]
    %v117 = vld [vmem:[#allocation7 + $0x1a8] sm:$0xff]
    %v118 = vld [vmem:[#allocation7 + $0x1b0] sm:$0xff]
    %v119 = vld [vmem:[#allocation7 + $0x1b8] sm:$0xff]
    %v120 = vld [vmem:[#allocation7 + $0x1c0] sm:$0xff]
    %v121 = vld [vmem:[#allocation7 + $0x1c8] sm:$0xff]
    %v122 = vld [vmem:[#allocation7 + $0x1d0] sm:$0xff]
    %v123 = vld [vmem:[#allocation7 + $0x1d8] sm:$0xff]
    %v124 = vld [vmem:[#allocation7 + $0x1e0] sm:$0xff]
    %v125 = vld [vmem:[#allocation7 + $0x1e8] sm:$0xff]
    %v126 = vld [vmem:[#allocation7 + $0x1f0] sm:$0xff]
    %v127 = vld [vmem:[#allocation7 + $0x1f8] sm:$0xff]
    %v128 = vld [vmem:[#allocation7 + $0x200] sm:$0xff]
    %v129 = vld [vmem:[#allocation7 + $0x208] sm:$0xff]
    %v130 = vld [vmem:[#allocation7 + $0x210] sm:$0xff]
    %v131 = vld [vmem:[#allocation7 + $0x218] sm:$0xff]
    %v132 = vld [vmem:[#allocation7 + $0x220] sm:$0xff]
    %v133 = vld [vmem:[#allocation7 + $0x228] sm:$0xff]
    %v134 = vld [vmem:[#allocation7 + $0x230] sm:$0xff]
    %v135 = vld [vmem:[#allocation7 + $0x238] sm:$0xff]
    %v136 = vld [vmem:[#allocation7 + $0x240] sm:$0xff]
    %v137 = vld [vmem:[#allocation7 + $0x248] sm:$0xff]
    %v138 = vld [vmem:[#allocation7 + $0x250] sm:$0xff]
    %v139 = vld [vmem:[#allocation7 + $0x258] sm:$0xff]
    %v140 = vld [vmem:[#allocation7 + $0x260] sm:$0xff]
    %v141 = vld [vmem:[#allocation7 + $0x268] sm:$0xff]
    %v142 = vld [vmem:[#allocation7 + $0x270] sm:$0xff]
    %v143 = vld [vmem:[#allocation7 + $0x278] sm:$0xff]
    %v144 = vld [vmem:[#allocation7 + $0x280] sm:$0xff]
    %v145 = vld [vmem:[#allocation7 + $0x288] sm:$0xff]
    %v146 = vld [vmem:[#allocation7 + $0x290] sm:$0xff]
    %v147 = vld [vmem:[#allocation7 + $0x298] sm:$0xff]
    %v148 = vld [vmem:[#allocation7 + $0x2a0] sm:$0xff]
    %v149 = vld [vmem:[#allocation7 + $0x2a8] sm:$0xff]
    %v150 = vld [vmem:[#allocation7 + $0x2b0] sm:$0xff]
    %v151 = vld [vmem:[#allocation7 + $0x2b8] sm:$0xff]
    %v152 = vld [vmem:[#allocation7 + $0x2c0] sm:$0xff]
    %v153 = vld [vmem:[#allocation7 + $0x2c8] sm:$0xff]
    %v154 = vld [vmem:[#allocation7 + $0x2d0] sm:$0xff]
    %v155 = vld [vmem:[#allocation7 + $0x2d8] sm:$0xff]
    %v156 = vld [vmem:[#allocation7 + $0x2e0] sm:$0xff]
    %v157 = vld [vmem:[#allocation7 + $0x2e8] sm:$0xff]
    %v158 = vld [vmem:[#allocation7 + $0x2f0] sm:$0xff]
    %v159 = vld [vmem:[#allocation7 + $0x2f8] sm:$0xff]
    %v160 = vld [vmem:[#allocation7 + $0x300] sm:$0xff]
    %v161 = vld [vmem:[#allocation7 + $0x308] sm:$0xff]
    %v162 = vld [vmem:[#allocation7 + $0x310] sm:$0xff]
    %v163 = vld [vmem:[#allocation7 + $0x318] sm:$0xff]
    %v164 = vld [vmem:[#allocation7 + $0x320] sm:$0xff]
    %v165 = vld [vmem:[#allocation7 + $0x328] sm:$0xff]
    %v166 = vld [vmem:[#allocation7 + $0x330] sm:$0xff]
    %v167 = vld [vmem:[#allocation7 + $0x338] sm:$0xff]
    %v168 = vld [vmem:[#allocation7 + $0x340] sm:$0xff]
    %v169 = vld [vmem:[#allocation7 + $0x348] sm:$0xff]
    %v170 = vld [vmem:[#allocation7 + $0x350] sm:$0xff]
    %v171 = vld [vmem:[#allocation7 + $0x358] sm:$0xff]
    %v172 = vld [vmem:[#allocation7 + $0x360] sm:$0xff]
    %v173 = vld [vmem:[#allocation7 + $0x368] sm:$0xff]
    %v174 = vld [vmem:[#allocation7 + $0x370] sm:$0xff]
    %v175 = vld [vmem:[#allocation7 + $0x378] sm:$0xff]
    %v176 = vld [vmem:[#allocation7 + $0x380] sm:$0xff]
    %v177 = vld [vmem:[#allocation7 + $0x388] sm:$0xff]
    %v178 = vld [vmem:[#allocation7 + $0x390] sm:$0xff]
    %v179 = vld [vmem:[#allocation7 + $0x398] sm:$0xff]
    %v180 = vld [vmem:[#allocation7 + $0x3a0] sm:$0xff]
    %v181 = vld [vmem:[#allocation7 + $0x3a8] sm:$0xff]
    %v182 = vld [vmem:[#allocation7 + $0x3b0] sm:$0xff]
    %v183 = vld [vmem:[#allocation7 + $0x3b8] sm:$0xff]
    %v184 = vld [vmem:[#allocation7 + $0x3c0] sm:$0xff]
    %v185 = vld [vmem:[#allocation7 + $0x3c8] sm:$0xff]
    %v186 = vld [vmem:[#allocation7 + $0x3d0] sm:$0xff]
    %v187 = vld [vmem:[#allocation7 + $0x3d8] sm:$0xff]
    %v188 = vld [vmem:[#allocation7 + $0x3e0] sm:$0xff]
    %v189 = vld [vmem:[#allocation7 + $0x3e8] sm:$0xff]
    %v190 = vld [vmem:[#allocation7 + $0x3f0] sm:$0xff]
    %v191 = vld [vmem:[#allocation7 + $0x3f8] sm:$0xff]
    %192 = vmatpush.msra.mxu0 %v124
    %193 = vmatpush.msra.mxu0 %v120
    %194 = vmatpush.msra.mxu0 %v116
    %195 = vmatpush.msra.mxu0 %v112
    %196 = vmatpush.msra.mxu0 %v108
    %197 = vmatpush.msra.mxu0 %v104
    %198 = vmatpush.msra.mxu0 %v100
    %199 = vmatpush.msra.mxu0 %v96
    %200 = vmatpush.msra.mxu0 %v92
    %201 = vmatpush.msra.mxu0 %v88
    %202 = vmatpush.msra.mxu0 %v84
    %203 = vmatpush.msra.mxu0 %v80
    %204 = vmatpush.msra.mxu0 %v76
    %205 = vmatpush.msra.mxu0 %v72
    %206 = vmatpush.msra.mxu0 %v68
    %207 = vmatpush.msra.mxu0 %v64
    %208 = vmatmul.f32.gmra.mxu0 %v62
    %v209 = vpop.f32.mrf.mxu0
    %v210 = vadd.f32 0.0, %v209
    %211 = vdwg.mxu0
    %212 = vmatpush.msra.mxu0 %v188
    %213 = vmatpush.msra.mxu0 %v184
    %214 = vmatpush.msra.mxu0 %v180
    %215 = vmatpush.msra.mxu0 %v176
    %216 = vmatpush.msra.mxu0 %v172
    %217 = vmatpush.msra.mxu0 %v168
    %218 = vmatpush.msra.mxu0 %v164
    %219 = vmatpush.msra.mxu0 %v160
    %220 = vmatpush.msra.mxu0 %v156
    %221 = vmatpush.msra.mxu0 %v152
    %222 = vmatpush.msra.mxu0 %v148
    %223 = vmatpush.msra.mxu0 %v144
    %224 = vmatpush.msra.mxu0 %v140
    %225 = vmatpush.msra.mxu0 %v136
    %226 = vmatpush.msra.mxu0 %v132
    %227 = vmatpush.msra.mxu0 %v128
    %228 = vmatmul.f32.gmra.mxu0 %v63
    %v229 = vpop.f32.mrf.mxu0
    %v230 = vadd.f32 %v210, %v229
    %231 = vdwg.mxu0
    %232 = vmatpush.msra.mxu0 %v125
    %233 = vmatpush.msra.mxu0 %v121
    %234 = vmatpush.msra.mxu0 %v117
    %235 = vmatpush.msra.mxu0 %v113
    %236 = vmatpush.msra.mxu0 %v109
    %237 = vmatpush.msra.mxu0 %v105
    %238 = vmatpush.msra.mxu0 %v101
    %239 = vmatpush.msra.mxu0 %v97
    %240 = vmatpush.msra.mxu0 %v93
    %241 = vmatpush.msra.mxu0 %v89
    %242 = vmatpush.msra.mxu0 %v85
    %243 = vmatpush.msra.mxu0 %v81
    %244 = vmatpush.msra.mxu0 %v77
    %245 = vmatpush.msra.mxu0 %v73
    %246 = vmatpush.msra.mxu0 %v69
    %247 = vmatpush.msra.mxu0 %v65
    %248 = vmatmul.f32.gmra.mxu0 %v62
    %v249 = vpop.f32.mrf.mxu0
    %v250 = vadd.f32 0.0, %v249
    %251 = vdwg.mxu0
    %252 = vmatpush.msra.mxu0 %v189
    %253 = vmatpush.msra.mxu0 %v185
    %254 = vmatpush.msra.mxu0 %v181
    %255 = vmatpush.msra.mxu0 %v177
    %256 = vmatpush.msra.mxu0 %v173
    %257 = vmatpush.msra.mxu0 %v169
    %258 = vmatpush.msra.mxu0 %v165
    %259 = vmatpush.msra.mxu0 %v161
    %260 = vmatpush.msra.mxu0 %v157
    %261 = vmatpush.msra.mxu0 %v153
    %262 = vmatpush.msra.mxu0 %v149
    %263 = vmatpush.msra.mxu0 %v145
    %264 = vmatpush.msra.mxu0 %v141
    %265 = vmatpush.msra.mxu0 %v137
    %266 = vmatpush.msra.mxu0 %v133
    %267 = vmatpush.msra.mxu0 %v129
    %268 = vmatmul.f32.gmra.mxu0 %v63
    %v269 = vpop.f32.mrf.mxu0
    %v270 = vadd.f32 %v250, %v269
    %271 = vdwg.mxu0
    %272 = vmatpush.msra.mxu0 %v126
    %273 = vmatpush.msra.mxu0 %v122
    %274 = vmatpush.msra.mxu0 %v118
    %275 = vmatpush.msra.mxu0 %v114
    %276 = vmatpush.msra.mxu0 %v110
    %277 = vmatpush.msra.mxu0 %v106
    %278 = vmatpush.msra.mxu0 %v102
    %279 = vmatpush.msra.mxu0 %v98
    %280 = vmatpush.msra.mxu0 %v94
    %281 = vmatpush.msra.mxu0 %v90
    %282 = vmatpush.msra.mxu0 %v86
    %283 = vmatpush.msra.mxu0 %v82
    %284 = vmatpush.msra.mxu0 %v78
    %285 = vmatpush.msra.mxu0 %v74
    %286 = vmatpush.msra.mxu0 %v70
    %287 = vmatpush.msra.mxu0 %v66
    %288 = vmatmul.f32.gmra.mxu0 %v62
    %v289 = vpop.f32.mrf.mxu0
    %v290 = vadd.f32 0.0, %v289
    %291 = vdwg.mxu0
    %292 = vmatpush.msra.mxu0 %v190
    %293 = vmatpush.msra.mxu0 %v186
    %294 = vmatpush.msra.mxu0 %v182
    %295 = vmatpush.msra.mxu0 %v178
    %296 = vmatpush.msra.mxu0 %v174
    %297 = vmatpush.msra.mxu0 %v170
    %298 = vmatpush.msra.mxu0 %v166
    %299 = vmatpush.msra.mxu0 %v162
    %300 = vmatpush.msra.mxu0 %v158
    %301 = vmatpush.msra.mxu0 %v154
    %302 = vmatpush.msra.mxu0 %v150
    %303 = vmatpush.msra.mxu0 %v146
    %304 = vmatpush.msra.mxu0 %v142
    %305 = vmatpush.msra.mxu0 %v138
    %306 = vmatpush.msra.mxu0 %v134
    %307 = vmatpush.msra.mxu0 %v130
    %308 = vmatmul.f32.gmra.mxu0 %v63
    %v309 = vpop.f32.mrf.mxu0
    %v310 = vadd.f32 %v290, %v309
    %311 = vdwg.mxu0
    %312 = vmatpush.msra.mxu0 %v127
    %313 = vmatpush.msra.mxu0 %v123
    %314 = vmatpush.msra.mxu0 %v119
    %315 = vmatpush.msra.mxu0 %v115
    %316 = vmatpush.msra.mxu0 %v111
    %317 = vmatpush.msra.mxu0 %v107
    %318 = vmatpush.msra.mxu0 %v103
    %319 = vmatpush.msra.mxu0 %v99
    %320 = vmatpush.msra.mxu0 %v95
    %321 = vmatpush.msra.mxu0 %v91
    %322 = vmatpush.msra.mxu0 %v87
    %323 = vmatpush.msra.mxu0 %v83
    %324 = vmatpush.msra.mxu0 %v79
    %325 = vmatpush.msra.mxu0 %v75
    %326 = vmatpush.msra.mxu0 %v71
    %327 = vmatpush.msra.mxu0 %v67
    %328 = vmatmul.f32.gmra.mxu0 %v62
    %v329 = vpop.f32.mrf.mxu0
    %v330 = vadd.f32 0.0, %v329
    %331 = vdwg.mxu0
    %332 = vmatpush.msra.mxu0 %v191
    %333 = vmatpush.msra.mxu0 %v187
    %334 = vmatpush.msra.mxu0 %v183
    %335 = vmatpush.msra.mxu0 %v179
    %336 = vmatpush.msra.mxu0 %v175
    %337 = vmatpush.msra.mxu0 %v171
    %338 = vmatpush.msra.mxu0 %v167
    %339 = vmatpush.msra.mxu0 %v163
    %340 = vmatpush.msra.mxu0 %v159
    %341 = vmatpush.msra.mxu0 %v155
    %342 = vmatpush.msra.mxu0 %v151
    %343 = vmatpush.msra.mxu0 %v147
    %344 = vmatpush.msra.mxu0 %v143
    %345 = vmatpush.msra.mxu0 %v139
    %346 = vmatpush.msra.mxu0 %v135
    %347 = vmatpush.msra.mxu0 %v131
    %348 = vmatmul.f32.gmra.mxu0 %v63
    %v349 = vpop.f32.mrf.mxu0
    %v350 = vadd.f32 %v330, %v349
    %351 = vdwg.mxu0
    %v352 = vmul.f32 %v230, %v230
    %v353 = vmul.f32 %v270, %v270
    %v354 = vmul.f32 %v310, %v310
    %v355 = vmul.f32 %v350, %v350
    %v356 = vadd.f32 %v352, %v354
    %v357 = vadd.f32 %v353, %v355
    %v358 = vrsqrt.pop %v356
    %v359 = vmul.f32 %v358, %v356
    %v360 = vmul.f32 %v359, %v358
    %v361 = vmul.f32 0.5, %v360
    %v362 = vsub.f32 1.5, %v361
    %v363 = vmul.f32 %v358, %v362
    %v364 = vmul.f32 %v356, %v363
    %vm365 = vcmp.eq.f32.partialorder %v356, inf
    %v366 = vsel %vm365, %v356, %v364
    %vm367 = vcmp.eq.f32.partialorder %v356, 0.0
    %v368 = vand.u32 %v356, 2147483648
    %v369 = vsel %vm367, %v368, %v366
    %v370 = vrsqrt.pop %v357
    %v371 = vmul.f32 %v370, %v357
    %v372 = vmul.f32 %v371, %v370
    %v373 = vmul.f32 0.5, %v372
    %v374 = vsub.f32 1.5, %v373
    %v375 = vmul.f32 %v370, %v374
    %v376 = vmul.f32 %v357, %v375
    %vm377 = vcmp.eq.f32.partialorder %v357, inf
    %v378 = vsel %vm377, %v357, %v376
    %vm379 = vcmp.eq.f32.partialorder %v357, 0.0
    %v380 = vand.u32 %v357, 2147483648
    %v381 = vsel %vm379, %v380, %v378
    %v382 = vadd.f32 %v369, %v381
    %383 = vadd.xlane.f32.xlu0 %v382
    %v384 = vpop.xlane.xlu0 %383
    %v385 = vrot.slane %v384, 4
    %v386 = vadd.f32 %v384, %v385
    %v387 = vrot.slane %v386, 2
    %v388 = vadd.f32 %v386, %v387
    %v389 = vrot.slane %v388, 1
    %v390 = vadd.f32 %v388, %v389
    %s391 = vtos %v390
    %v392 = vstv %s391
    %393 = vst [vmem:[#allocation8] sm:$0x1] %v392
    // Predicated region
    $region26: #{tpu_custom_call.1} parent=1 // pred_check
      _
    $region27: #{tpu_custom_call.1} parent=1 // pred_check_branch
      %395 = sbr.rel (0) target = $region29
    $region28: #{tpu_custom_call.1} parent=1 // pred_region
      %397 = vsyncadd [#allocation4], 0
      %s399 = sshll.u32 [#allocation8], 4
      %s400 = int_to_ptr.vmem [resolvable:$true] %s399
      %s401 = sshll.u32 %s3, 4
      %s402 = int_to_ptr.hbm [resolvable:$true] %s401
      %404 = dma.vmem_to_hbm [thread:$0]  %s400, 16, %s402, [#allocation4]
    $region29: #{tpu_custom_call.1} parent=1 // pred_fallthru
      _
    // Predicated region
    $region30: #{tpu_custom_call.1} parent=1 // pred_check
      _
    $region31: #{tpu_custom_call.1} parent=1 // pred_check_branch
      %406 = sbr.rel (0) target = $region33
    $region32: #{tpu_custom_call.1} parent=1 // pred_region
      %408 = dma.done [#allocation4], 16
    $region33: #{tpu_custom_call.1} parent=1 // pred_fallthru
      _
    %409 = vsyncpa [#allocation3], 1
    %410 = vsyncpa [#allocation6], 1
    %411 = vsyncpa [#allocation4], 1

</llo_original>
